<compile_context>
chip_gen: v5e
topology: v5e:2x2
jax: 0.10.0
libtpu: 0.0.40
codegen_flags: <defaults>
</compile_context>

<pallas_src>
import jax
import jax.numpy as jnp
from jax.experimental import pallas as pl
from jax.experimental.pallas import tpu as pltpu

LANE = 128       # vreg lane width (last dim)


def _cdiv(a, b):
    return (a + b - 1) // b


def _round_up(x, m):
    return _cdiv(x, m) * m


def _pad2d(a, rows, cols, dtype):
    r, c = a.shape
    if r == rows and c == cols and a.dtype == jnp.dtype(dtype):
        return a
    return jnp.zeros((rows, cols), dtype).at[:r, :c].set(a.astype(dtype))


def two_layer_net_kernel(x_ref, w1_ref, b1_ref, w2_ref, b2_ref, out_ref):
    """Fused Linear -> ReLU -> Linear on one batch tile.

    x is cast to the weights' compute dtype in-kernel (VPU), both matmuls
    accumulate in f32 on the MXU, bias + ReLU run in f32 on the VPU.
    """
    x = x_ref[...].astype(w1_ref.dtype)                       # in-kernel cast
    h = jnp.dot(x, w1_ref[...], preferred_element_type=jnp.float32)
    h = jnp.maximum(h + b1_ref[...], 0.0)                     # f32 bias + ReLU
    y = jnp.dot(h.astype(w2_ref.dtype), w2_ref[...],
                preferred_element_type=jnp.float32)
    out_ref[...] = (y + b2_ref[...]).astype(out_ref.dtype)


def prepare_params(w1, b1, w2, b2, compute_dtype=jnp.bfloat16):
    """One-time prep: transpose PyTorch-layout weights, cast to the compute
    dtype, and pad the hidden (and, when large, output) feature dims to lane
    multiples so the kernel sees lane-dense operands.

    Args:
      w1: [H, I], b1: [H], w2: [O, H], b2: [O]  (nn.Linear layout)
    Returns:
      ((w1_t, b1_p, w2_t, b2_p), (I, H, O))
    """
    H, I = w1.shape
    O = w2.shape[0]
    Hp = _round_up(H, LANE)
    # Lane-dense output only pays off when the true O is >= one lane; tiny O
    # keeps masked stores and avoids 16x padded HBM writes + a slice pass.
    Op = _round_up(O, LANE) if O >= LANE else O
    w1_t = _pad2d(jnp.transpose(w1), I, Hp, compute_dtype)     # (I,  Hp)
    w2_t = _pad2d(jnp.transpose(w2), Hp, Op, compute_dtype)    # (Hp, Op)
    b1_p = _pad2d(b1.reshape(1, H), 1, Hp, jnp.float32)        # (1,  Hp) f32
    b2_p = _pad2d(b2.reshape(1, O), 1, Op, jnp.float32)        # (1,  Op) f32
    return (w1_t, b1_p, w2_t, b2_p), (I, H, O)


def two_layer_net(x, params, dims, *, batch_tile=1024):
    """Forward pass of TwoLayerNet.

    Args:
      x: [B, input_size] (any float dtype; cast to compute dtype in-kernel)
      params: output of prepare_params (transposed / padded weights + biases)
      dims: (I, H, O) original feature sizes
      batch_tile: max rows per grid step (balanced across steps).
    Returns:
      [B, output_size] in x.dtype
    """
    w1_t, b1_p, w2_t, b2_p = params
    I, H, O = dims
    B = x.shape[0]
    assert x.shape[1] == I and w1_t.shape[0] == I
    Hp = w1_t.shape[1]
    Op = w2_t.shape[1]
    compute_dtype = w1_t.dtype

    # Packed-sublane granule: 16 rows for bf16/fp16, 8 for f32.
    pack = 16 if jnp.dtype(compute_dtype).itemsize == 2 else 8

    # Balanced batch tiling: split B into ~equal tiles <= batch_tile, rounded
    # up to the pack granule (avoids a mostly-padding final step).
    n_steps = max(1, _cdiv(B, batch_tile))
    TB = _round_up(_cdiv(B, n_steps), pack)
    grid0 = _cdiv(B, TB)
    Bp = grid0 * TB

    # Only pad the batch dim (original dtype); no wrapper-side cast of x.
    x_p = x if Bp == B else jnp.zeros((Bp, I), x.dtype).at[:B, :].set(x)

    # Explicit VMEM budget: double-buffered x/out tiles + single-buffered
    # weights/biases, with headroom. Covers v5e's 16 MiB default scoped limit
    # and stays well under v7x's 64 MiB physical VMEM for resident weights.
    xb = jnp.dtype(x.dtype).itemsize
    cb = jnp.dtype(compute_dtype).itemsize
    vmem_need = (2 * TB * (I * xb + Op * xb)          # pipelined x / out tiles
                 + (I * Hp + Hp * Op) * cb            # resident weights (1 buf)
                 + (Hp + Op) * 4)                     # resident f32 biases
    vmem_limit = int(max(32 << 20, min(vmem_need + vmem_need // 2 + (4 << 20),
                                       112 << 20)))

    resident = dict(pipeline_mode=pl.Buffered(1))      # never re-DMA'd -> 1 buf

    out = pl.pallas_call(
        two_layer_net_kernel,
        out_shape=jax.ShapeDtypeStruct((Bp, Op), x.dtype),
        grid_spec=pltpu.PrefetchScalarGridSpec(
            num_scalar_prefetch=0,
            grid=(grid0,),
            in_specs=[
                pl.BlockSpec((TB, I), lambda i: (i, 0)),            # x tiles
                pl.BlockSpec((I, Hp), lambda i: (0, 0), **resident),  # W1^T
                pl.BlockSpec((1, Hp), lambda i: (0, 0), **resident),  # b1
                pl.BlockSpec((Hp, Op), lambda i: (0, 0), **resident),  # W2^T
                pl.BlockSpec((1, Op), lambda i: (0, 0), **resident),  # b2
            ],
            out_specs=pl.BlockSpec((TB, Op), lambda i: (i, 0)),
        ),
        compiler_params=pltpu.CompilerParams(
            # Batch axis is independent; "parallel" lets the compiler shard it
            # across v7x's two TensorCores (harmless no-op on v5e/v6e).
            dimension_semantics=("parallel",),
            vmem_limit_bytes=vmem_limit,
        ),
    )(x_p, w1_t, b1_p, w2_t, b2_p)

    if Bp == B and Op == O:
        return out
    return out[:B, :O]


def init_params(key, input_size, hidden_size, output_size, dtype=jnp.float32):
    """Deterministic init mimicking torch.nn.Linear default U(-1/sqrt(fan_in), +)."""
    k1, k2, k3, k4 = jax.random.split(key, 4)
    bound1 = 1.0 / (input_size ** 0.5)
    bound2 = 1.0 / (hidden_size ** 0.5)
    w1 = jax.random.uniform(k1, (hidden_size, input_size), dtype,
                            minval=-bound1, maxval=bound1)
    b1 = jax.random.uniform(k2, (hidden_size,), dtype,
                            minval=-bound1, maxval=bound1)
    w2 = jax.random.uniform(k3, (output_size, hidden_size), dtype,
                            minval=-bound2, maxval=bound2)
    b2 = jax.random.uniform(k4, (output_size,), dtype,
                            minval=-bound2, maxval=bound2)
    return w1, b1, w2, b2


if __name__ == "__main__":
    # Small shapes consistent with TwoLayerNet(input_size, hidden_size, output_size).
    batch, input_size, hidden_size, output_size = 8, 16, 32, 8

    key = jax.random.PRNGKey(0)
    kx, kp = jax.random.split(key)
    x = jax.random.normal(kx, (batch, input_size), jnp.float32)
    w1, b1, w2, b2 = init_params(kp, input_size, hidden_size, output_size)

    # One-time parameter prep (transpose + padding + bf16 cast), off the
    # per-call path. bf16 operands hit the native MXU fast path on v5e/v6e/v7x
    # while accumulation / bias / ReLU stay in f32.
    params, dims = prepare_params(w1, b1, w2, b2, compute_dtype=jnp.bfloat16)

    out = two_layer_net(x, params, dims)
    out = jax.block_until_ready(out)

    # Reference check against plain JAX (same semantics as the PyTorch forward).
    ref = jnp.maximum(x @ w1.T + b1, 0.0) @ w2.T + b2
    assert out.shape == (batch, output_size)
    # bf16 operand tolerance (f32 accumulation); use 1e-5 if compute_dtype=f32.
    assert jnp.allclose(out, ref, atol=3e-2, rtol=3e-2)

    print("KERNEL_OK")
</pallas_src>

<mosaic_0001>
module attributes {stable_mosaic.version = 11 : i64} {
  func.func @two_layer_net_kernel(%arg0: i32, %arg1: memref<16x16xf32, #tpu.memory_space<vmem>>, %arg2: memref<16x128xbf16, #tpu.memory_space<vmem>>, %arg3: memref<1x128xf32, #tpu.memory_space<vmem>>, %arg4: memref<128x8xbf16, #tpu.memory_space<vmem>>, %arg5: memref<1x8xf32, #tpu.memory_space<vmem>>, %arg6: memref<16x8xf32, #tpu.memory_space<vmem>>) attributes {dimension_semantics = [#tpu.dimension_semantics<parallel>], iteration_bounds = array<i64: 1>, scalar_prefetch = 0 : i64, scratch_operands = 0 : i64, tpu.core_type = #tpu.core_type<tc>, window_params = [{transform_indices = @transform_0, window_bounds = array<i64: 16, 16>}, {pipeline_mode = #tpu.pipeline_mode<synchronous>, transform_indices = @transform_1, window_bounds = array<i64: 16, 128>}, {pipeline_mode = #tpu.pipeline_mode<synchronous>, transform_indices = @transform_2, window_bounds = array<i64: 1, 128>}, {pipeline_mode = #tpu.pipeline_mode<synchronous>, transform_indices = @transform_3, window_bounds = array<i64: 128, 8>}, {pipeline_mode = #tpu.pipeline_mode<synchronous>, transform_indices = @transform_4, window_bounds = array<i64: 1, 8>}, {transform_indices = @transform_5, window_bounds = array<i64: 16, 8>}]} {
    %c0 = arith.constant 0 : index
    %c0_0 = arith.constant 0 : index
    %0 = vector.load %arg1[%c0, %c0_0] : memref<16x16xf32, #tpu.memory_space<vmem>>, vector<16x16xf32>
    %1 = arith.truncf %0 : vector<16x16xf32> to vector<16x16xbf16>
    %c0_1 = arith.constant 0 : index
    %c0_2 = arith.constant 0 : index
    %2 = vector.load %arg2[%c0_1, %c0_2] : memref<16x128xbf16, #tpu.memory_space<vmem>>, vector<16x128xbf16>
    %cst = arith.constant dense<0.000000e+00> : vector<16x128xf32>
    %3 = tpu.matmul %1, %2, %cst {dimension_numbers = #tpu.dot_dimension_numbers<[1], [0], [0], [1], [0, 0, 1, 1], [], []>} : vector<16x16xbf16>, vector<16x128xbf16>, vector<16x128xf32> -> vector<16x128xf32>
    %c0_3 = arith.constant 0 : index
    %c0_4 = arith.constant 0 : index
    %4 = vector.load %arg3[%c0_3, %c0_4] : memref<1x128xf32, #tpu.memory_space<vmem>>, vector<1x128xf32>
    %5 = vector.broadcast %4 : vector<1x128xf32> to vector<16x128xf32>
    %6 = arith.addf %3, %5 : vector<16x128xf32>
    %cst_5 = arith.constant 0.000000e+00 : f32
    %7 = vector.broadcast %cst_5 : f32 to vector<16x128xf32>
    %8 = arith.maximumf %6, %7 : vector<16x128xf32>
    %9 = arith.truncf %8 : vector<16x128xf32> to vector<16x128xbf16>
    %c0_6 = arith.constant 0 : index
    %c0_7 = arith.constant 0 : index
    %10 = vector.load %arg4[%c0_6, %c0_7] : memref<128x8xbf16, #tpu.memory_space<vmem>>, vector<128x8xbf16>
    %cst_8 = arith.constant dense<0.000000e+00> : vector<16x8xf32>
    %11 = tpu.matmul %9, %10, %cst_8 {dimension_numbers = #tpu.dot_dimension_numbers<[1], [0], [0], [1], [0, 0, 1, 1], [], []>} : vector<16x128xbf16>, vector<128x8xbf16>, vector<16x8xf32> -> vector<16x8xf32>
    %c0_9 = arith.constant 0 : index
    %c0_10 = arith.constant 0 : index
    %12 = vector.load %arg5[%c0_9, %c0_10] : memref<1x8xf32, #tpu.memory_space<vmem>>, vector<1x8xf32>
    %13 = vector.broadcast %12 : vector<1x8xf32> to vector<16x8xf32>
    %14 = arith.addf %11, %13 : vector<16x8xf32>
    %c0_11 = arith.constant 0 : index
    %c0_12 = arith.constant 0 : index
    %15 = vector.load %arg6[%c0_11, %c0_12] : memref<16x8xf32, #tpu.memory_space<vmem>>, vector<16x8xf32>
    tpu.vector_store %arg6[%c0_11, %c0_12], %14 {strides = array<i32>} : memref<16x8xf32, #tpu.memory_space<vmem>>, vector<16x8xf32>,
    return
  }
  func.func @transform_0(%arg0: i32) -> (i32, i32) {
    %c0_i32 = arith.constant 0 : i32
    %c0_i32_0 = arith.constant 0 : i32
    return %arg0, %c0_i32 : i32, i32
  }
  func.func @transform_1(%arg0: i32) -> (i32, i32) {
    %c0_i32 = arith.constant 0 : i32
    %c0_i32_0 = arith.constant 0 : i32
    %c0_i32_1 = arith.constant 0 : i32
    return %c0_i32, %c0_i32_0 : i32, i32
  }
  func.func @transform_2(%arg0: i32) -> (i32, i32) {
    %c0_i32 = arith.constant 0 : i32
    %c0_i32_0 = arith.constant 0 : i32
    %c0_i32_1 = arith.constant 0 : i32
    return %c0_i32, %c0_i32_0 : i32, i32
  }
  func.func @transform_3(%arg0: i32) -> (i32, i32) {
    %c0_i32 = arith.constant 0 : i32
    %c0_i32_0 = arith.constant 0 : i32
    %c0_i32_1 = arith.constant 0 : i32
    return %c0_i32, %c0_i32_0 : i32, i32
  }
  func.func @transform_4(%arg0: i32) -> (i32, i32) {
    %c0_i32 = arith.constant 0 : i32
    %c0_i32_0 = arith.constant 0 : i32
    %c0_i32_1 = arith.constant 0 : i32
    return %c0_i32, %c0_i32_0 : i32, i32
  }
  func.func @transform_5(%arg0: i32) -> (i32, i32) {
    %c0_i32 = arith.constant 0 : i32
    %c0_i32_0 = arith.constant 0 : i32
    return %arg0, %c0_i32 : i32, i32
  }
}

</mosaic_0001>

<llo_original>
// kernel: tpu_custom_call.1
$region0: #{tpu_custom_call.1}
  #allocation0 [shape = 'u32[]', space=smem, size = 0x4, offset = 0x4, fixed_abs, tag = 'smem constant byte address 0x4 - core index']
  #allocation1 [shape = 'u32[72,128]{1,0:T(1,128)}', space=vmem, size = 0x9000, scoped, tag = 'internal scratch']
  %s0 = inlined_call_operand.vmem [shape: f32[16,16], index: 0, kind: input, shape index: {}]
  %s1 = inlined_call_operand.vmem [shape: bf16[16,128], index: 1, kind: input, shape index: {}]
  %s2 = inlined_call_operand.vmem [shape: f32[1,128], index: 2, kind: input, shape index: {}]
  %s3 = inlined_call_operand.vmem [shape: bf16[128,8], index: 3, kind: input, shape index: {}]
  %s4 = inlined_call_operand.vmem [shape: f32[1,8], index: 4, kind: input, shape index: {}]
  %s5 = inlined_call_operand.vmem [shape: f32[16,8], index: 5, kind: output, shape index: {}]
  %s6 = sld [smem:[#allocation0]]
  $region30: #{tpu_custom_call.1} parent=0
    _
  %s8 = ssub.s32 1, %s6
  %s9 = scalar_select 0, %s8, %s6
  // Predicated region
  $region2: #{tpu_custom_call.1} parent=0 // pred_check
    _
  $region3: #{tpu_custom_call.1} parent=0 // pred_check_branch
    %11 = sbr.rel (0) target = $region5
  $region4: #{tpu_custom_call.1} parent=0 // pred_region
    _
  $region5: #{tpu_custom_call.1} parent=0 // pred_fallthru
    _
  // Predicated region
  $region6: #{tpu_custom_call.1} parent=0 // pred_check
    _
  $region7: #{tpu_custom_call.1} parent=0 // pred_check_branch
    %13 = sbr.rel (0) target = $region9
  $region8: #{tpu_custom_call.1} parent=0 // pred_region
    _
  $region9: #{tpu_custom_call.1} parent=0 // pred_fallthru
    _
  // Predicated region
  $region10: #{tpu_custom_call.1} parent=0 // pred_check
    _
  $region11: #{tpu_custom_call.1} parent=0 // pred_check_branch
    %15 = sbr.rel (0) target = $region13
  $region12: #{tpu_custom_call.1} parent=0 // pred_region
    _
  $region13: #{tpu_custom_call.1} parent=0 // pred_fallthru
    _
  // Predicated region
  $region14: #{tpu_custom_call.1} parent=0 // pred_check
    _
  $region15: #{tpu_custom_call.1} parent=0 // pred_check_branch
    %17 = sbr.rel (0) target = $region17
  $region16: #{tpu_custom_call.1} parent=0 // pred_region
    _
  $region17: #{tpu_custom_call.1} parent=0 // pred_fallthru
    _
  // Predicated region
  $region18: #{tpu_custom_call.1} parent=0 // pred_check
    _
  $region19: #{tpu_custom_call.1} parent=0 // pred_check_branch
    %19 = sbr.rel (0) target = $region21
  $region20: #{tpu_custom_call.1} parent=0 // pred_region
    _
  $region21: #{tpu_custom_call.1} parent=0 // pred_fallthru
    _
  %v21 = vld [vmem:[%s0] sm:$0xff]
  %v22 = vld [vmem:[%s0 + $0x8] sm:$0xff]
  %v23 = vpack.c.bf16 %v22, %v21
  %v24 = vld [vmem:[%s1] sm:$0xf]
  %v25 = vld [vmem:[%s1 + $0x4] sm:$0xf]
  %v26 = vld [vmem:[%s2] sm:$0x1]
  %v28 = vperm.slane %v26, 0
  %v32 = vunpack.c.l.b16 %v24
  %v33 = vunpack.c.l.b16 %v25
  %v34 = vpack.c.b16 %v33, %v32
  %vm36 = vcmask 130048
  %v38 = vsel %vm36, %v23, 0
  %40 = vmatpush.bf16.msra.mxu0 0
  %41 = vmatpush.bf16.msra.mxu0 0
  %42 = vmatpush.bf16.msra.mxu0 0
  %43 = vmatpush.bf16.msra.mxu0 0
  %44 = vmatpush.bf16.msra.mxu0 0
  %45 = vmatpush.bf16.msra.mxu0 0
  %46 = vmatpush.bf16.msra.mxu0 0
  %47 = vmatpush.bf16.msra.mxu0 %v34
  %48 = vmatmul.bf16.gmra.mxu0 %v38
  %v49 = vpop.f32.mrf.mxu0
  %v50 = vadd.f32 %v28, %v49
  %v51 = vpop.f32.mrf.mxu0
  %v52 = vadd.f32 %v28, %v51
  %53 = vdwg.mxu0
  %v54 = vmax.f32 %v50, 0.0
  %v55 = vmax.f32 %v52, 0.0
  %v56 = vpack.c.bf16 %v55, %v54
  %v57 = vld [vmem:[%s3] sm:$0xf]
  %v58 = vld [vmem:[%s3 + $0x4] sm:$0xf]
  %v59 = vld [vmem:[%s3 + $0x8] sm:$0xf]
  %v60 = vld [vmem:[%s3 + $0xc] sm:$0xf]
  %v61 = vld [vmem:[%s3 + $0x10] sm:$0xf]
  %v62 = vld [vmem:[%s3 + $0x14] sm:$0xf]
  %v63 = vld [vmem:[%s3 + $0x18] sm:$0xf]
  %v64 = vld [vmem:[%s3 + $0x1c] sm:$0xf]
  %v65 = vld [vmem:[%s3 + $0x20] sm:$0xf]
  %v66 = vld [vmem:[%s3 + $0x24] sm:$0xf]
  %v67 = vld [vmem:[%s3 + $0x28] sm:$0xf]
  %v68 = vld [vmem:[%s3 + $0x2c] sm:$0xf]
  %v69 = vld [vmem:[%s3 + $0x30] sm:$0xf]
  %v70 = vld [vmem:[%s3 + $0x34] sm:$0xf]
  %v71 = vld [vmem:[%s3 + $0x38] sm:$0xf]
  %v72 = vld [vmem:[%s3 + $0x3c] sm:$0xf]
  %v73 = vld [vmem:[%s4] sm:$0x1]
  %v75 = vperm.slane %v73, 0
  %v93 = vunpack.c.l.b16 %v57
  %v94 = vunpack.c.l.b16 %v58
  %v95 = vunpack.c.l.b16 %v59
  %v96 = vunpack.c.l.b16 %v60
  %v97 = vunpack.c.l.b16 %v61
  %v98 = vunpack.c.l.b16 %v62
  %v99 = vunpack.c.l.b16 %v63
  %v100 = vunpack.c.l.b16 %v64
  %v101 = vunpack.c.l.b16 %v65
  %v102 = vunpack.c.l.b16 %v66
  %v103 = vunpack.c.l.b16 %v67
  %v104 = vunpack.c.l.b16 %v68
  %v105 = vunpack.c.l.b16 %v69
  %v106 = vunpack.c.l.b16 %v70
  %v107 = vunpack.c.l.b16 %v71
  %v108 = vunpack.c.l.b16 %v72
  %v109 = vpack.c.b16 %v94, %v93
  %v110 = vpack.c.b16 %v96, %v95
  %v111 = vpack.c.b16 %v98, %v97
  %v112 = vpack.c.b16 %v100, %v99
  %v113 = vpack.c.b16 %v102, %v101
  %v114 = vpack.c.b16 %v104, %v103
  %v115 = vpack.c.b16 %v106, %v105
  %v116 = vpack.c.b16 %v108, %v107
  %125 = vmatpush.bf16.msra.mxu0 %v116
  %126 = vmatpush.bf16.msra.mxu0 %v115
  %127 = vmatpush.bf16.msra.mxu0 %v114
  %128 = vmatpush.bf16.msra.mxu0 %v113
  %129 = vmatpush.bf16.msra.mxu0 %v112
  %130 = vmatpush.bf16.msra.mxu0 %v111
  %131 = vmatpush.bf16.msra.mxu0 %v110
  %132 = vmatpush.bf16.msra.mxu0 %v109
  %133 = vmatmul.bf16.gmra.mxu0 %v56
  %v134 = vpop.f32.mrf.mxu0
  %v135 = vadd.f32 %v75, %v134
  %v136 = vpop.f32.mrf.mxu0
  %v137 = vadd.f32 %v75, %v136
  %138 = vdwg.mxu0
  %vm139 = vcmask 64512
  %140 = vst.msk [vmem:[%s5] sm:$0xff] %vm139, %v135
  %141 = vst.msk [vmem:[%s5 + $0x8] sm:$0xff] %vm139, %v137
  // Predicated region
  $region22: #{tpu_custom_call.1} parent=0 // pred_check
    _
  $region23: #{tpu_custom_call.1} parent=0 // pred_check_branch
    %143 = sbr.rel (0) target = $region25
  $region24: #{tpu_custom_call.1} parent=0 // pred_region
    _
  $region25: #{tpu_custom_call.1} parent=0 // pred_fallthru
    _
  // Predicated region
  $region26: #{tpu_custom_call.1} parent=0 // pred_check
    _
  $region27: #{tpu_custom_call.1} parent=0 // pred_check_branch
    %145 = sbr.rel (0) target = $region29
  $region28: #{tpu_custom_call.1} parent=0 // pred_region
    _
  $region29: #{tpu_custom_call.1} parent=0 // pred_fallthru
    _

</llo_original>
